<compile_context>
chip_gen: v5e
topology: v5e:2x2
jax: 0.10.0
libtpu: 0.0.40
codegen_flags: <defaults>
</compile_context>

<pallas_src>
import functools

import jax
import jax.numpy as jnp
from jax import lax
from jax.experimental import pallas as pl
from jax.experimental.pallas import tpu as pltpu

# Fixed, non-trainable Sobel taps (for the pure-JAX reference).
GX = ((-1.0, 0.0, 1.0),
      (-2.0, 0.0, 2.0),
      (-1.0, 0.0, 1.0))
GY = ((-1.0, -2.0, -1.0),
      ( 0.0,  0.0,  0.0),
      ( 1.0,  2.0,  1.0))


def _round_up(a, b):
    return -(-a // b) * b


def _sobel_kernel(x_ref, o_ref, *, H, W):
    # x_ref: (TB, 3*H*W) block -- TB images, channels folded into the lane axis.
    # o_ref: (TB, 2*H*W) block -- lanes [0, HW) = gx (Ox), [HW, 2*HW) = gy (Oy).
    HW = H * W

    # Channel slices are lane-aligned whenever HW % 128 == 0. Widen to f32
    # before the sum, then a single 1/3 scale.
    x0 = x_ref[:, 0 * HW:1 * HW].astype(jnp.float32)
    x1 = x_ref[:, 1 * HW:2 * HW].astype(jnp.float32)
    x2 = x_ref[:, 2 * HW:3 * HW].astype(jnp.float32)
    s = (x0 + x1 + x2) * (1.0 / 3.0)                    # (TB, HW)

    lane = lax.broadcasted_iota(jnp.int32, s.shape, 1)
    zero = jnp.float32(0.0)

    def shift(v, d):
        # result[..., i] = v[..., i - d] on the flattened spatial index (cyclic;
        # the wrapped entries are exactly the ones masked to zero below).
        return pltpu.roll(v, d % HW, axis=1)

    # ---- vertical part ([1,2,1]^T blur and [-1,0,1]^T diff): flat shifts +-W ----
    top = lane < W                 # row 0   : no neighbour above -> zero padding
    bot = lane >= HW - W           # row H-1 : no neighbour below -> zero padding
    s_up = jnp.where(top, zero, shift(s, W))            # s[h-1, w]
    s_dn = jnp.where(bot, zero, shift(s, -W))           # s[h+1, w]
    v_blur = s_up + (s + s) + s_dn
    v_diff = s_dn - s_up

    # ---- horizontal part (+-1 lane shifts); mask the per-row wrap column ----
    if W & (W - 1) == 0:           # power-of-two width: bitwise mask (VPU-cheap)
        col = lane & (W - 1)
    else:                          # general width: vector remainder
        col = lax.rem(lane, W)
    left_edge = col == 0
    right_edge = col == W - 1

    def shift_lr(v):
        l = jnp.where(left_edge, zero, shift(v, 1))     # v[h, w-1]
        r = jnp.where(right_edge, zero, shift(v, -1))   # v[h, w+1]
        return l, r

    vb_l, vb_r = shift_lr(v_blur)
    vd_l, vd_r = shift_lr(v_diff)

    gx = vb_r - vb_l
    gy = vd_l + (v_diff + v_diff) + vd_r

    # Two direct lane-dense stores (no sublane concatenate / relayout copy).
    o_ref[:, 0:HW] = gx.astype(o_ref.dtype)
    o_ref[:, HW:2 * HW] = gy.astype(o_ref.dtype)


def _pick_tb(n, c, hw, itemsize, vmem_budget):
    """Batch-tile size: fill sublanes, fit VMEM, keep >=2 grid steps for v7x."""
    hw_pad = _round_up(hw, 128)
    # Per-batch-row VMEM: double-buffered input+output tiles + ~16 live f32 temps.
    per_row = 2 * (c + 2) * hw_pad * itemsize + 16 * hw_pad * 4
    tb_fit = max(1, vmem_budget // per_row)
    tb = min(n, tb_fit, 512)
    if tb >= 8:
        tb = (tb // 8) * 8                       # sublane-aligned second-minor dim
        if n >= 16:
            # v7x has 2 TensorCores: keep at least 2 grid steps so both get work.
            tb = min(tb, _round_up(pl.cdiv(n, 2), 8))
    # else: tiny batch (tb == n, single full-dim block) or very large images
    # (VMEM-limited); for the latter see the row-tiling TODO in sobel_filter.
    return max(1, tb)


def sobel_filter(x, *, tb=None):
    """x: (N, 3, H, W) -> (N, 2, H, W); same semantics as the PyTorch SobelFilter."""
    N, C, H, W = x.shape
    assert C == 3, "SobelFilter expects 3 input channels"
    HW = H * W
    itemsize = jnp.dtype(x.dtype).itemsize

    # Size everything from the hardware VMEM capacity (64 MiB/TC on v7x,
    # 128 MiB on v5e/v6e), with a conservative fallback.
    try:
        vmem_cap = int(pltpu.get_tpu_info().vmem_capacity_bytes)
    except Exception:
        vmem_cap = 64 * 1024 * 1024

    if tb is None:
        tb = _pick_tb(N, C, HW, itemsize, int(0.45 * vmem_cap))
    tb = max(1, min(tb, N))

    # Lane-dense layout: fold channels into the lane axis (free, row-major
    # reshape). Pad the batch to a multiple of TB so every block is full; the
    # padded rows compute zeros and are sliced off below.
    xf = x.reshape(N, C * HW)
    n_pad = _round_up(N, tb)
    if n_pad != N:
        xf = jnp.pad(xf, ((0, n_pad - N), (0, 0)))

    # Padding-aware VMEM request: the (TB, C*HW)/(TB, 2*HW) tiles round TB up to
    # 8 sublanes and HW up to 128 lanes; double-buffered, plus f32 temporaries.
    hw_pad = _round_up(HW, 128)
    tb_pad = _round_up(tb, 8)
    est = (2 * (C + 2) * itemsize + 16 * 4) * hw_pad * tb_pad
    vmem_limit = int(min(max(2 * est, 16 * 1024 * 1024), int(0.9 * vmem_cap)))
    # TODO(synk): images too large for even a single (TB=1, C*HW) block need a
    # second grid axis over row tiles with a 1-row halo so the block stays at
    # the ~85%-of-roofline size on v7x's 64 MiB VMEM as well as v5e/v6e's 128 MiB.

    out_flat = pl.pallas_call(
        functools.partial(_sobel_kernel, H=H, W=W),
        out_shape=jax.ShapeDtypeStruct((n_pad, 2 * HW), x.dtype),
        grid=(n_pad // tb,),
        in_specs=[pl.BlockSpec((tb, C * HW), lambda n: (n, 0))],
        out_specs=pl.BlockSpec((tb, 2 * HW), lambda n: (n, 0)),
        compiler_params=pltpu.CompilerParams(
            dimension_semantics=("parallel",),
            vmem_limit_bytes=vmem_limit,
        ),
    )(xf)
    return out_flat[:N].reshape(N, 2, H, W)


def _reference(x):
    # Pure-JAX reference replicating F.conv2d(x, weight, stride=1, padding=1).
    gx = jnp.asarray(GX, jnp.float32)
    gy = jnp.asarray(GY, jnp.float32)
    w = jnp.stack([jnp.broadcast_to(gx, (3, 3, 3)),
                   jnp.broadcast_to(gy, (3, 3, 3))]) / 3.0  # (2, 3, 3, 3) OIHW
    return lax.conv_general_dilated(
        x.astype(jnp.float32), w, window_strides=(1, 1), padding=((1, 1), (1, 1)),
        dimension_numbers=("NCHW", "OIHW", "NCHW")).astype(x.dtype)


if __name__ == "__main__":
    # Primary check: the module's natural small shape.
    x = jax.random.normal(jax.random.PRNGKey(0), (2, 3, 16, 16), dtype=jnp.float32)
    out = sobel_filter(x)
    jax.block_until_ready(out)
    ref = _reference(x)
    assert out.shape == (2, 2, 16, 16)
    assert jnp.allclose(out, ref, atol=1e-4, rtol=1e-4), float(
        jnp.max(jnp.abs(out - ref)))

    # Second check exercising the batched path (TB=8, padded batch, 2 grid steps).
    x2 = jax.random.normal(jax.random.PRNGKey(1), (10, 3, 16, 16), dtype=jnp.float32)
    out2 = sobel_filter(x2)
    jax.block_until_ready(out2)
    ref2 = _reference(x2)
    assert out2.shape == (10, 2, 16, 16)
    assert jnp.allclose(out2, ref2, atol=1e-4, rtol=1e-4), float(
        jnp.max(jnp.abs(out2 - ref2)))

    print("KERNEL_OK")
</pallas_src>

<mosaic_0001>
module attributes {stable_mosaic.version = 11 : i64} {
  func.func @_sobel_kernel(%arg0: i32, %arg1: memref<2x768xf32, #tpu.memory_space<vmem>>, %arg2: memref<2x512xf32, #tpu.memory_space<vmem>>) attributes {dimension_semantics = [#tpu.dimension_semantics<parallel>], iteration_bounds = array<i64: 1>, scalar_prefetch = 0 : i64, scratch_operands = 0 : i64, tpu.core_type = #tpu.core_type<tc>, window_params = [{transform_indices = @transform_0, window_bounds = array<i64: 2, 768>}, {transform_indices = @transform_1, window_bounds = array<i64: 2, 512>}]} {
    %c0 = arith.constant 0 : index
    %c0_0 = arith.constant 0 : index
    %0 = vector.load %arg1[%c0, %c0_0] : memref<2x768xf32, #tpu.memory_space<vmem>>, vector<2x256xf32>
    %c0_1 = arith.constant 0 : index
    %c256 = arith.constant 256 : index
    %1 = vector.load %arg1[%c0_1, %c256] : memref<2x768xf32, #tpu.memory_space<vmem>>, vector<2x256xf32>
    %c0_2 = arith.constant 0 : index
    %c512 = arith.constant 512 : index
    %2 = vector.load %arg1[%c0_2, %c512] : memref<2x768xf32, #tpu.memory_space<vmem>>, vector<2x256xf32>
    %3 = arith.addf %0, %1 : vector<2x256xf32>
    %4 = arith.addf %3, %2 : vector<2x256xf32>
    %cst = arith.constant 0.333333343 : f32
    %5 = vector.broadcast %cst : f32 to vector<2x256xf32>
    %6 = arith.mulf %4, %5 : vector<2x256xf32>
    %7 = tpu.iota {dimensions = array<i32: 1>} : vector<2x256xi32>
    %c16_i32 = arith.constant 16 : i32
    %8 = vector.broadcast %c16_i32 : i32 to vector<2x256xi32>
    %9 = arith.cmpi slt, %7, %8 : vector<2x256xi32>
    %c240_i32 = arith.constant 240 : i32
    %10 = vector.broadcast %c240_i32 : i32 to vector<2x256xi32>
    %11 = arith.cmpi sge, %7, %10 : vector<2x256xi32>
    %c16_i32_3 = arith.constant 16 : i32
    %12 = tpu.dynamic_rotate %6 by %c16_i32_3 dim 1 : vector<2x256xf32>, i32 -> vector<2x256xf32>
    %cst_4 = arith.constant 0.000000e+00 : f32
    %13 = vector.broadcast %cst_4 : f32 to vector<2x256xf32>
    %14 = arith.select %9, %13, %12 : vector<2x256xi1>, vector<2x256xf32>
    %c240_i32_5 = arith.constant 240 : i32
    %15 = tpu.dynamic_rotate %6 by %c240_i32_5 dim 1 : vector<2x256xf32>, i32 -> vector<2x256xf32>
    %cst_6 = arith.constant 0.000000e+00 : f32
    %16 = vector.broadcast %cst_6 : f32 to vector<2x256xf32>
    %17 = arith.select %11, %16, %15 : vector<2x256xi1>, vector<2x256xf32>
    %18 = arith.addf %6, %6 : vector<2x256xf32>
    %19 = arith.addf %14, %18 : vector<2x256xf32>
    %20 = arith.addf %19, %17 : vector<2x256xf32>
    %21 = arith.subf %17, %14 : vector<2x256xf32>
    %c15_i32 = arith.constant 15 : i32
    %22 = vector.broadcast %c15_i32 : i32 to vector<2x256xi32>
    %23 = arith.andi %7, %22 : vector<2x256xi32>
    %c0_i32 = arith.constant 0 : i32
    %24 = vector.broadcast %c0_i32 : i32 to vector<2x256xi32>
    %25 = arith.cmpi eq, %23, %24 : vector<2x256xi32>
    %c15_i32_7 = arith.constant 15 : i32
    %26 = vector.broadcast %c15_i32_7 : i32 to vector<2x256xi32>
    %27 = arith.cmpi eq, %23, %26 : vector<2x256xi32>
    %c1_i32 = arith.constant 1 : i32
    %28 = tpu.dynamic_rotate %20 by %c1_i32 dim 1 : vector<2x256xf32>, i32 -> vector<2x256xf32>
    %cst_8 = arith.constant 0.000000e+00 : f32
    %29 = vector.broadcast %cst_8 : f32 to vector<2x256xf32>
    %30 = arith.select %25, %29, %28 : vector<2x256xi1>, vector<2x256xf32>
    %c255_i32 = arith.constant 255 : i32
    %31 = tpu.dynamic_rotate %20 by %c255_i32 dim 1 : vector<2x256xf32>, i32 -> vector<2x256xf32>
    %cst_9 = arith.constant 0.000000e+00 : f32
    %32 = vector.broadcast %cst_9 : f32 to vector<2x256xf32>
    %33 = arith.select %27, %32, %31 : vector<2x256xi1>, vector<2x256xf32>
    %c1_i32_10 = arith.constant 1 : i32
    %34 = tpu.dynamic_rotate %21 by %c1_i32_10 dim 1 : vector<2x256xf32>, i32 -> vector<2x256xf32>
    %cst_11 = arith.constant 0.000000e+00 : f32
    %35 = vector.broadcast %cst_11 : f32 to vector<2x256xf32>
    %36 = arith.select %25, %35, %34 : vector<2x256xi1>, vector<2x256xf32>
    %c255_i32_12 = arith.constant 255 : i32
    %37 = tpu.dynamic_rotate %21 by %c255_i32_12 dim 1 : vector<2x256xf32>, i32 -> vector<2x256xf32>
    %cst_13 = arith.constant 0.000000e+00 : f32
    %38 = vector.broadcast %cst_13 : f32 to vector<2x256xf32>
    %39 = arith.select %27, %38, %37 : vector<2x256xi1>, vector<2x256xf32>
    %40 = arith.subf %33, %30 : vector<2x256xf32>
    %41 = arith.addf %21, %21 : vector<2x256xf32>
    %42 = arith.addf %36, %41 : vector<2x256xf32>
    %43 = arith.addf %42, %39 : vector<2x256xf32>
    %c0_14 = arith.constant 0 : index
    %c0_15 = arith.constant 0 : index
    %44 = vector.load %arg2[%c0_14, %c0_15] : memref<2x512xf32, #tpu.memory_space<vmem>>, vector<2x256xf32>
    tpu.vector_store %arg2[%c0_14, %c0_15], %40 {strides = array<i32>} : memref<2x512xf32, #tpu.memory_space<vmem>>, vector<2x256xf32>,
    %c0_16 = arith.constant 0 : index
    %c256_17 = arith.constant 256 : index
    %45 = vector.load %arg2[%c0_16, %c256_17] : memref<2x512xf32, #tpu.memory_space<vmem>>, vector<2x256xf32>
    tpu.vector_store %arg2[%c0_16, %c256_17], %43 {strides = array<i32>} : memref<2x512xf32, #tpu.memory_space<vmem>>, vector<2x256xf32>,
    return
  }
  func.func @transform_0(%arg0: i32) -> (i32, i32) {
    %c0_i32 = arith.constant 0 : i32
    %c0_i32_0 = arith.constant 0 : i32
    return %arg0, %c0_i32 : i32, i32
  }
  func.func @transform_1(%arg0: i32) -> (i32, i32) {
    %c0_i32 = arith.constant 0 : i32
    %c0_i32_0 = arith.constant 0 : i32
    return %arg0, %c0_i32 : i32, i32
  }
}

</mosaic_0001>

<llo_original>
// kernel: tpu_custom_call.1
$region0: #{tpu_custom_call.1}
  #allocation0 [shape = 'u32[]', space=smem, size = 0x4, offset = 0x4, fixed_abs, tag = 'smem constant byte address 0x4 - core index']
  #allocation1 [shape = 'u32[72,128]{1,0:T(1,128)}', space=vmem, size = 0x9000, scoped, tag = 'internal scratch']
  %s0 = inlined_call_operand.hbm [shape: f32[2,768], index: 0, kind: input, shape index: {}]
  %s1 = inlined_call_operand.hbm [shape: f32[2,512], index: 1, kind: output, shape index: {}]
  %s2 = sld [smem:[#allocation0]]
  $region18: #{tpu_custom_call.1} parent=0
    _
  %s4 = ssub.s32 1, %s2
  %s5 = scalar_select 0, %s4, %s2
  $region1: #{tpu_custom_call.1} parent=0
    #allocation2 [shape = 'u8[6144]{0}', space=vmem, size = 0x1800, scoped, tag = 'input window, operand 0, single buffered']
    #allocation3 [shape = 's32[1]{0}', space=sflag, size = 0x4, scoped, tag = 'scoped memory for tpu_custom_call.1']
    #allocation4 [shape = 's32[1]{0}', space=sflag, size = 0x4, scoped, tag = 'scoped memory for tpu_custom_call.1']
    #allocation5 [shape = 'u8[4096]{0}', space=vmem, size = 0x1000, scoped, tag = 'output window, operand 0, single buffered']
    %6 = vsyncpa [#allocation3], 0
    %7 = vsyncpa [#allocation4], 0
    // Predicated region
    $region2: #{tpu_custom_call.1} parent=1 // pred_check
      _
    $region3: #{tpu_custom_call.1} parent=1 // pred_check_branch
      %9 = sbr.rel (0) target = $region5
    $region4: #{tpu_custom_call.1} parent=1 // pred_region
      %11 = vsyncadd [#allocation3], 0
      %s13 = sshll.u32 %s0, 4
      %s14 = int_to_ptr.hbm [resolvable:$true] %s13
      %s15 = sshll.u32 [#allocation2], 4
      %s16 = int_to_ptr.vmem [resolvable:$true] %s15
      %18 = dma.hbm_to_vmem [thread:$0]  %s14, 192, %s16, [#allocation3]
    $region5: #{tpu_custom_call.1} parent=1 // pred_fallthru
      _
    // Predicated region
    $region6: #{tpu_custom_call.1} parent=1 // pred_check
      _
    $region7: #{tpu_custom_call.1} parent=1 // pred_check_branch
      %20 = sbr.rel (0) target = $region9
    $region8: #{tpu_custom_call.1} parent=1 // pred_region
      %22 = dma.done [#allocation3], 192
    $region9: #{tpu_custom_call.1} parent=1 // pred_fallthru
      _
    %v23 = vld [vmem:[#allocation2] sm:$0xf]
    %v24 = vld [vmem:[#allocation2 + $0x4] sm:$0xf]
    %v25 = vld [vmem:[#allocation2 + $0x8] sm:$0xf]
    %v26 = vadd.f32 %v23, %v24
    %v27 = vadd.f32 %v26, %v25
    %v28 = vmul.f32 %v27, 0.33333334
    %v29 = vlaneseq
    %v30 = vand.u32 %v29, 127
    %v31 = vadd.s32 %v30, 128
    %vm32 = vcmp.lt.s32.totalorder %v30, 16
    %vm33 = vcmp.lt.s32.totalorder %v31, 16
    %vm34 = vcmp.ge.s32.totalorder %v30, 240
    %vm35 = vcmp.ge.s32.totalorder %v31, 240
    %37 = vst [vmem:[#allocation1] ss:$4 sm:$0xff] %v28
    %v38 = vld.sshfl [vmem:[#allocation1] sm:$0xff pattern:$0x73625140]
    %v39 = vld.sshfl [vmem:[#allocation1 + $0x8] sm:$0xff pattern:$0x73625140]
    %42 = vrot.lane.b32.xlu0 %v38, 16
    %v43 = vpop.permute.xlu0 %42
    %44 = vrot.lane.b32.xlu0 %v39, 16
    %v45 = vpop.permute.xlu0 %44
    %v46 = vsel %vm32, %v43, %v45
    %v47 = vsel %vm32, %v45, %v43
    %v48 = vsel %vm32, 0.0, %v47
    %v49 = vsel %vm33, 0.0, %v46
    %50 = vst [vmem:[#allocation1] ss:$4 sm:$0xff] %v28
    %v51 = vld.sshfl [vmem:[#allocation1] sm:$0xff pattern:$0x73625140]
    %v52 = vld.sshfl [vmem:[#allocation1 + $0x8] sm:$0xff pattern:$0x73625140]
    %55 = vrot.lane.b32.xlu0 %v51, 112
    %v56 = vpop.permute.xlu0 %55
    %57 = vrot.lane.b32.xlu0 %v52, 112
    %v58 = vpop.permute.xlu0 %57
    %vm59 = vcmp.lt.s32.totalorder %v30, 112
    %v60 = vsel %vm59, %v56, %v58
    %v61 = vsel %vm59, %v58, %v56
    %v62 = vsel %vm34, 0.0, %v60
    %v63 = vsel %vm35, 0.0, %v61
    %v64 = vadd.f32 %v28, %v28
    %66 = vst [vmem:[#allocation1] ss:$4 sm:$0xff] %v64
    %v67 = vld.sshfl [vmem:[#allocation1] sm:$0xff pattern:$0x73625140]
    %v68 = vld.sshfl [vmem:[#allocation1 + $0x8] sm:$0xff pattern:$0x73625140]
    %v71 = vadd.f32 %v48, %v67
    %v72 = vadd.f32 %v49, %v68
    %v73 = vadd.f32 %v71, %v62
    %v74 = vadd.f32 %v72, %v63
    %v75 = vsub.f32 %v62, %v48
    %v76 = vsub.f32 %v63, %v49
    %v77 = vand.u32 %v30, 15
    %v78 = vand.u32 %v31, 15
    %vm79 = vcmp.eq.s32.totalorder %v77, 0
    %vm80 = vcmp.eq.s32.totalorder %v78, 0
    %vm81 = vcmp.eq.s32.totalorder %v77, 15
    %vm82 = vcmp.eq.s32.totalorder %v78, 15
    %83 = vrot.lane.b32.xlu0 %v73, 1
    %v84 = vpop.permute.xlu0 %83
    %85 = vrot.lane.b32.xlu0 %v74, 1
    %v86 = vpop.permute.xlu0 %85
    %vm87 = vcmp.lt.s32.totalorder %v30, 1
    %v88 = vsel %vm87, %v84, %v86
    %v89 = vsel %vm87, %v86, %v84
    %v90 = vsel %vm79, 0.0, %v89
    %v91 = vsel %vm80, 0.0, %v88
    %92 = vrot.lane.b32.xlu0 %v73, 127
    %v93 = vpop.permute.xlu0 %92
    %94 = vrot.lane.b32.xlu0 %v74, 127
    %v95 = vpop.permute.xlu0 %94
    %vm96 = vcmp.lt.s32.totalorder %v30, 127
    %v97 = vsel %vm96, %v93, %v95
    %v98 = vsel %vm96, %v95, %v93
    %v99 = vsel %vm81, 0.0, %v97
    %v100 = vsel %vm82, 0.0, %v98
    %101 = vrot.lane.b32.xlu0 %v75, 1
    %v102 = vpop.permute.xlu0 %101
    %103 = vrot.lane.b32.xlu0 %v76, 1
    %v104 = vpop.permute.xlu0 %103
    %v105 = vsel %vm87, %v102, %v104
    %v106 = vsel %vm87, %v104, %v102
    %v107 = vsel %vm79, 0.0, %v106
    %v108 = vsel %vm80, 0.0, %v105
    %109 = vrot.lane.b32.xlu0 %v75, 127
    %v110 = vpop.permute.xlu0 %109
    %111 = vrot.lane.b32.xlu0 %v76, 127
    %v112 = vpop.permute.xlu0 %111
    %v113 = vsel %vm96, %v110, %v112
    %v114 = vsel %vm96, %v112, %v110
    %v115 = vsel %vm81, 0.0, %v113
    %v116 = vsel %vm82, 0.0, %v114
    %v117 = vsub.f32 %v99, %v90
    %v118 = vsub.f32 %v100, %v91
    %v119 = vadd.f32 %v75, %v75
    %v120 = vadd.f32 %v76, %v76
    %v121 = vadd.f32 %v107, %v119
    %v122 = vadd.f32 %v108, %v120
    %v123 = vadd.f32 %v121, %v115
    %v124 = vadd.f32 %v122, %v116
    %v127 = vrot.slane %v118, 6
    %vm128 = vcmask 1041408
    %v129 = vsel %vm128, %v117, %v127
    %131 = vst [vmem:[#allocation5] sm:$0xf] %v129
    %v134 = vrot.slane %v124, 6
    %v135 = vsel %vm128, %v123, %v134
    %137 = vst [vmem:[#allocation5 + $0x4] sm:$0xf] %v135
    // Predicated region
    $region10: #{tpu_custom_call.1} parent=1 // pred_check
      _
    $region11: #{tpu_custom_call.1} parent=1 // pred_check_branch
      %139 = sbr.rel (0) target = $region13
    $region12: #{tpu_custom_call.1} parent=1 // pred_region
      %141 = vsyncadd [#allocation4], 0
      %s143 = sshll.u32 [#allocation5], 4
      %s144 = int_to_ptr.vmem [resolvable:$true] %s143
      %s145 = sshll.u32 %s1, 4
      %s146 = int_to_ptr.hbm [resolvable:$true] %s145
      %148 = dma.vmem_to_hbm [thread:$0]  %s144, 128, %s146, [#allocation4]
    $region13: #{tpu_custom_call.1} parent=1 // pred_fallthru
      _
    // Predicated region
    $region14: #{tpu_custom_call.1} parent=1 // pred_check
      _
    $region15: #{tpu_custom_call.1} parent=1 // pred_check_branch
      %150 = sbr.rel (0) target = $region17
    $region16: #{tpu_custom_call.1} parent=1 // pred_region
      %152 = dma.done [#allocation4], 128
    $region17: #{tpu_custom_call.1} parent=1 // pred_fallthru
      _
    %153 = vsyncpa [#allocation3], 1
    %154 = vsyncpa [#allocation4], 1

</llo_original>
